<compile_context>
chip_gen: v7x
topology: tpu7x:2x2x1
jax: 0.10.0
libtpu: 0.0.40
codegen_flags: <defaults>
</compile_context>

<pallas_src>
import functools
import math

import jax
import jax.numpy as jnp
from jax import lax
from jax.experimental import pallas as pl
from jax.experimental.pallas import tpu as pltpu


def _round_up(x, m):
    return ((x + m - 1) // m) * m


# ----------------------------------------------------------------------------
# Fused Pallas kernel: whole forward pass, everything VMEM-resident.
# ----------------------------------------------------------------------------
def _fused_kernel(r, r1, xs_ref, m1_ref, m2_ref, g_ref, sel_ref, bl_ref,
                  o_ref, y1_ref):
    # --- conv1 (3x3, 3->16) + ReLU -------------------------------------------
    # Height taps = three row-shifted matmuls; width taps folded into m1.
    # Bias is folded into m1[0] row 15 (input lane 15 is a constant 1).
    # m1 column 48 carries the constant 1 forward for the conv2 bias.
    acc1 = jnp.dot(xs_ref[0:r1, :], m1_ref[0], preferred_element_type=jnp.float32)
    acc1 = acc1 + jnp.dot(xs_ref[1:r1 + 1, :], m1_ref[1],
                          preferred_element_type=jnp.float32)
    acc1 = acc1 + jnp.dot(xs_ref[2:r1 + 2, :], m1_ref[2],
                          preferred_element_type=jnp.float32)
    y1_ref[...] = jnp.maximum(acc1, 0.0)            # (r1, 64): 48 conv lanes + const

    # --- conv2 (3x2, 16->32) + ReLU ------------------------------------------
    # Bias folded into m2[0] row 48 (y1 lane 48 == 1).
    acc2 = jnp.dot(y1_ref[0:r, :], m2_ref[0], preferred_element_type=jnp.float32)
    acc2 = acc2 + jnp.dot(y1_ref[1:r + 1, :], m2_ref[1],
                          preferred_element_type=jnp.float32)
    acc2 = acc2 + jnp.dot(y1_ref[2:r + 2, :], m2_ref[2],
                          preferred_element_type=jnp.float32)
    y2 = jnp.maximum(acc2, 0.0)                      # (r, 64)

    # --- Linear(512 -> 2) ------------------------------------------------------
    # Per-row (height-dependent, torch-flatten-order) weights g[0]/g[1], then a
    # per-sample segment sum via the 0/1 selection matrix (tiny MXU matmul).
    a0 = jnp.sum(y2 * g_ref[0], axis=1, keepdims=True)          # (r, 1)
    a1 = jnp.sum(y2 * g_ref[1], axis=1, keepdims=True)          # (r, 1)
    sel = sel_ref[...]                                          # (N, r)
    l0 = jnp.dot(sel, a0, preferred_element_type=jnp.float32) + bl_ref[0:1, 0:1]
    l1 = jnp.dot(sel, a1, preferred_element_type=jnp.float32) + bl_ref[0:1, 1:2]

    # --- 2-class softmax (EUP reciprocal) -------------------------------------
    m = jnp.maximum(l0, l1)
    e0 = jnp.exp(l0 - m)
    e1 = jnp.exp(l1 - m)
    inv = pl.reciprocal(e0 + e1, approx=True)
    o_ref[:, 0:1] = e0 * inv
    o_ref[:, 1:2] = e1 * inv


# ----------------------------------------------------------------------------
# Parameter init (PyTorch-like) and host-side packing into kernel layout.
# ----------------------------------------------------------------------------
def init_params(key):
    ks = jax.random.split(key, 6)

    def u(k, shape, fan_in):
        bound = 1.0 / math.sqrt(fan_in)
        return jax.random.uniform(k, shape, jnp.float32, -bound, bound)

    w1 = u(ks[0], (3, 3, 3, 16), 3 * 3 * 3)      # conv1, HWIO
    b1 = u(ks[1], (16,), 3 * 3 * 3)
    w2 = u(ks[2], (3, 2, 16, 32), 16 * 3 * 2)    # conv2, HWIO
    b2 = u(ks[3], (32,), 16 * 3 * 2)
    wl_pt = u(ks[4], (2, 512), 512)              # torch Linear layout; in-dim = (c, h, w)
    bl = u(ks[5], (2,), 512)
    return dict(w1=w1, b1=b1, w2=w2, b2=b2, wl_pt=wl_pt, bl=bl)


def pack_params(params, n):
    """One-time host-side repack of weights into the stacked-row kernel layout."""
    w1, b1 = params["w1"], params["b1"]
    w2, b2 = params["w2"], params["b2"]
    wl_pt, bl = params["wl_pt"], params["bl"]
    r = 12 * n

    # conv1: block-Toeplitz over width.
    #   m1[di, w*3+ci, wo*16+co] = w1[di, w-wo, ci, co]
    # Row 15 of tap 0 carries the bias (input lane 15 == 1); column 48 of tap 0
    # forwards the constant 1 into y1 lane 48 for the conv2 bias fold.
    m1 = jnp.zeros((3, 16, 64), jnp.float32)
    for di in range(3):
        for wo in range(3):
            for dj in range(3):
                w = wo + dj
                m1 = m1.at[di, w * 3:w * 3 + 3, wo * 16:wo * 16 + 16].set(w1[di, dj])
    m1 = m1.at[0, 15, 0:48].set(jnp.tile(b1, 3))
    m1 = m1.at[0, 15, 48].set(1.0)

    # conv2: m2[di, w*16+ci, wo*32+co] = w2[di, w-wo, ci, co]
    # Row 48 of tap 0 carries the bias (y1 lane 48 == 1).
    m2 = jnp.zeros((3, 64, 64), jnp.float32)
    for di in range(3):
        for wo in range(2):
            for dj in range(2):
                w = wo + dj
                m2 = m2.at[di, w * 16:w * 16 + 16, wo * 32:wo * 32 + 32].set(w2[di, dj])
    m2 = m2.at[0, 48, 0:64].set(jnp.tile(b2, 2))

    # Linear: torch flattens (N, 32, 8, 2) as (c, h, w).  Re-lay per output row h
    # with lane order (w*32 + c) to match y2's lanes; zero rows for h >= 8
    # (the stride-12 padding rows).  Both classes packed into one array.
    wl4 = wl_pt.reshape(2, 32, 8, 2)                              # (o, c, h, w)
    gh = jnp.transpose(wl4, (0, 2, 3, 1)).reshape(2, 8, 64)       # (o, h, w*32+c)
    g = jnp.zeros((2, 12, 64), jnp.float32).at[:, :8, :].set(gh)  # (o, 12, 64)
    g = jnp.tile(g, (1, n, 1))                                    # (o, r, 64)

    # 0/1 selection matrix summing each sample's 12 rows.
    sel = (jnp.arange(r)[None, :] // 12 == jnp.arange(n)[:, None]).astype(jnp.float32)

    return dict(m1=m1, m2=m2, g=g, sel=sel, bl=bl[None, :])


def _stack_input(x_nchw, rin):
    """NCHW -> padded NHWC -> rows stacked (12 per sample), lanes = w*3+c.

    Lane 15 is a constant 1 on every row (bias carrier for the conv fold)."""
    n = x_nchw.shape[0]
    x = jnp.transpose(x_nchw, (0, 2, 3, 1))                 # (n, 10, 3, 3)
    xp = jnp.pad(x, ((0, 0), (1, 1), (1, 1), (0, 0)))       # ZeroPad2d(1) -> (n, 12, 5, 3)
    xs = xp.reshape(n * 12, 15)
    xs = jnp.pad(xs, ((0, rin - n * 12), (0, 0)))           # zero rows for tap overreach
    ones = jnp.ones((rin, 1), jnp.float32)
    return jnp.concatenate([xs, ones], axis=1)              # (rin, 16), lane 15 == 1


# ----------------------------------------------------------------------------
# Forward (fused Pallas path) and pure-JAX reference.
# ----------------------------------------------------------------------------
def stock_model_forward(packed, x_nchw):
    n = x_nchw.shape[0]
    r = 12 * n                      # y2 rows (one per sample-height slot)
    r1 = _round_up(r + 2, 8)        # y1 rows (needs 2 extra for conv2 height taps)
    rin = _round_up(r1 + 2, 8)      # input rows (2 extra for conv1 height taps)
    xs = _stack_input(x_nchw, rin)

    kernel = functools.partial(_fused_kernel, r, r1)
    return pl.pallas_call(
        kernel,
        out_shape=jax.ShapeDtypeStruct((n, 2), jnp.float32),
        grid=(1,),
        in_specs=[
            pl.BlockSpec((rin, 16), lambda i: (0, 0)),         # stacked padded input
            pl.BlockSpec((3, 16, 64), lambda i: (0, 0, 0)),    # m1 (conv1 taps + bias)
            pl.BlockSpec((3, 64, 64), lambda i: (0, 0, 0)),    # m2 (conv2 taps + bias)
            pl.BlockSpec((2, r, 64), lambda i: (0, 0, 0)),     # linear weights (both classes)
            pl.BlockSpec((n, r), lambda i: (0, 0)),            # selection matrix
            pl.BlockSpec((1, 2), lambda i: (0, 0)),            # linear bias
        ],
        out_specs=pl.BlockSpec((n, 2), lambda i: (0, 0)),
        scratch_shapes=[pltpu.VMEM((r1, 64), jnp.float32)],    # y1 stays in VMEM
        compiler_params=pltpu.CompilerParams(
            dimension_semantics=("arbitrary",)),
    )(xs, packed["m1"], packed["m2"], packed["g"], packed["sel"], packed["bl"])


def reference_forward(params, x_nchw):
    x = jnp.transpose(x_nchw, (0, 2, 3, 1))
    xp = jnp.pad(x, ((0, 0), (1, 1), (1, 1), (0, 0)))
    dn = ("NHWC", "HWIO", "NHWC")
    y1 = jax.nn.relu(
        lax.conv_general_dilated(xp, params["w1"], (1, 1), "VALID",
                                 dimension_numbers=dn) + params["b1"])
    y2 = jax.nn.relu(
        lax.conv_general_dilated(y1, params["w2"], (1, 1), "VALID",
                                 dimension_numbers=dn) + params["b2"])
    feat = jnp.transpose(y2, (0, 3, 1, 2)).reshape(y2.shape[0], -1)  # NCHW flatten
    logits = feat @ params["wl_pt"].T + params["bl"]
    return jax.nn.softmax(logits, axis=1)


if __name__ == "__main__":
    key = jax.random.PRNGKey(0)
    pkey, xkey = jax.random.split(key)
    params = init_params(pkey)

    # Input implied by the module: (batch, 3, 10, 3) NCHW.
    x = jax.random.normal(xkey, (4, 3, 10, 3), jnp.float32)

    packed = pack_params(params, x.shape[0])
    forward = jax.jit(stock_model_forward)
    out = jax.block_until_ready(forward(packed, x))

    ref = reference_forward(params, x)
    assert out.shape == (4, 2)
    # Tolerance accounts for the approximate EUP reciprocal in the softmax.
    assert jnp.allclose(out, ref, atol=2e-3, rtol=2e-3)
    assert jnp.allclose(jnp.sum(out, axis=1), 1.0, atol=2e-3)

    print("KERNEL_OK")
</pallas_src>

<mosaic_0001>
module attributes {stable_mosaic.version = 11 : i64} {
  func.func @_fused_kernel(%arg0: i32, %arg1: memref<64x16xf32, #tpu.memory_space<vmem>>, %arg2: memref<3x16x64xf32, #tpu.memory_space<vmem>>, %arg3: memref<3x64x64xf32, #tpu.memory_space<vmem>>, %arg4: memref<2x48x64xf32, #tpu.memory_space<vmem>>, %arg5: memref<4x48xf32, #tpu.memory_space<vmem>>, %arg6: memref<1x2xf32, #tpu.memory_space<vmem>>, %arg7: memref<4x2xf32, #tpu.memory_space<vmem>>, %arg8: memref<56x64xf32, #tpu.memory_space<vmem>>) attributes {dimension_semantics = [#tpu.dimension_semantics<arbitrary>], iteration_bounds = array<i64: 1>, scalar_prefetch = 0 : i64, scratch_operands = 1 : i64, tpu.core_type = #tpu.core_type<tc>, window_params = [{pipeline_mode = #tpu.pipeline_mode<synchronous>, transform_indices = @transform_0, window_bounds = array<i64: 64, 16>}, {pipeline_mode = #tpu.pipeline_mode<synchronous>, transform_indices = @transform_1, window_bounds = array<i64: 3, 16, 64>}, {pipeline_mode = #tpu.pipeline_mode<synchronous>, transform_indices = @transform_2, window_bounds = array<i64: 3, 64, 64>}, {pipeline_mode = #tpu.pipeline_mode<synchronous>, transform_indices = @transform_3, window_bounds = array<i64: 2, 48, 64>}, {pipeline_mode = #tpu.pipeline_mode<synchronous>, transform_indices = @transform_4, window_bounds = array<i64: 4, 48>}, {pipeline_mode = #tpu.pipeline_mode<synchronous>, transform_indices = @transform_5, window_bounds = array<i64: 1, 2>}, {pipeline_mode = #tpu.pipeline_mode<synchronous>, transform_indices = @transform_6, window_bounds = array<i64: 4, 2>}]} {
    %c0 = arith.constant 0 : index
    %c0_0 = arith.constant 0 : index
    %0 = vector.load %arg1[%c0, %c0_0] : memref<64x16xf32, #tpu.memory_space<vmem>>, vector<56x16xf32>
    %c0_1 = arith.constant 0 : index
    %c0_2 = arith.constant 0 : index
    %c0_3 = arith.constant 0 : index
    %1 = vector.load %arg2[%c0_1, %c0_2, %c0_3] : memref<3x16x64xf32, #tpu.memory_space<vmem>>, vector<1x16x64xf32>
    %2 = vector.shape_cast %1 : vector<1x16x64xf32> to vector<16x64xf32>
    %cst = arith.constant dense<0.000000e+00> : vector<56x64xf32>
    %3 = tpu.matmul %0, %2, %cst {dimension_numbers = #tpu.dot_dimension_numbers<[1], [0], [0], [1], [0, 0, 1, 1], [], []>} : vector<56x16xf32>, vector<16x64xf32>, vector<56x64xf32> -> vector<56x64xf32>
    %c1 = arith.constant 1 : index
    %c0_4 = arith.constant 0 : index
    %4 = vector.load %arg1[%c1, %c0_4] : memref<64x16xf32, #tpu.memory_space<vmem>>, vector<56x16xf32>
    %c1_5 = arith.constant 1 : index
    %c0_6 = arith.constant 0 : index
    %c0_7 = arith.constant 0 : index
    %5 = vector.load %arg2[%c1_5, %c0_6, %c0_7] : memref<3x16x64xf32, #tpu.memory_space<vmem>>, vector<1x16x64xf32>
    %6 = vector.shape_cast %5 : vector<1x16x64xf32> to vector<16x64xf32>
    %cst_8 = arith.constant dense<0.000000e+00> : vector<56x64xf32>
    %7 = tpu.matmul %4, %6, %cst_8 {dimension_numbers = #tpu.dot_dimension_numbers<[1], [0], [0], [1], [0, 0, 1, 1], [], []>} : vector<56x16xf32>, vector<16x64xf32>, vector<56x64xf32> -> vector<56x64xf32>
    %8 = arith.addf %3, %7 : vector<56x64xf32>
    %c2 = arith.constant 2 : index
    %c0_9 = arith.constant 0 : index
    %9 = vector.load %arg1[%c2, %c0_9] : memref<64x16xf32, #tpu.memory_space<vmem>>, vector<56x16xf32>
    %c2_10 = arith.constant 2 : index
    %c0_11 = arith.constant 0 : index
    %c0_12 = arith.constant 0 : index
    %10 = vector.load %arg2[%c2_10, %c0_11, %c0_12] : memref<3x16x64xf32, #tpu.memory_space<vmem>>, vector<1x16x64xf32>
    %11 = vector.shape_cast %10 : vector<1x16x64xf32> to vector<16x64xf32>
    %cst_13 = arith.constant dense<0.000000e+00> : vector<56x64xf32>
    %12 = tpu.matmul %9, %11, %cst_13 {dimension_numbers = #tpu.dot_dimension_numbers<[1], [0], [0], [1], [0, 0, 1, 1], [], []>} : vector<56x16xf32>, vector<16x64xf32>, vector<56x64xf32> -> vector<56x64xf32>
    %13 = arith.addf %8, %12 : vector<56x64xf32>
    %cst_14 = arith.constant 0.000000e+00 : f32
    %14 = vector.broadcast %cst_14 : f32 to vector<56x64xf32>
    %15 = arith.maximumf %13, %14 : vector<56x64xf32>
    %c0_15 = arith.constant 0 : index
    %c0_16 = arith.constant 0 : index
    %16 = vector.load %arg8[%c0_15, %c0_16] : memref<56x64xf32, #tpu.memory_space<vmem>>, vector<56x64xf32>
    tpu.vector_store %arg8[%c0_15, %c0_16], %15 {strides = array<i32>} : memref<56x64xf32, #tpu.memory_space<vmem>>, vector<56x64xf32>,
    %c0_17 = arith.constant 0 : index
    %c0_18 = arith.constant 0 : index
    %17 = vector.load %arg8[%c0_17, %c0_18] : memref<56x64xf32, #tpu.memory_space<vmem>>, vector<48x64xf32>
    %c0_19 = arith.constant 0 : index
    %c0_20 = arith.constant 0 : index
    %c0_21 = arith.constant 0 : index
    %18 = vector.load %arg3[%c0_19, %c0_20, %c0_21] : memref<3x64x64xf32, #tpu.memory_space<vmem>>, vector<1x64x64xf32>
    %19 = vector.shape_cast %18 : vector<1x64x64xf32> to vector<64x64xf32>
    %cst_22 = arith.constant dense<0.000000e+00> : vector<48x64xf32>
    %20 = tpu.matmul %17, %19, %cst_22 {dimension_numbers = #tpu.dot_dimension_numbers<[1], [0], [0], [1], [0, 0, 1, 1], [], []>} : vector<48x64xf32>, vector<64x64xf32>, vector<48x64xf32> -> vector<48x64xf32>
    %c1_23 = arith.constant 1 : index
    %c0_24 = arith.constant 0 : index
    %21 = vector.load %arg8[%c1_23, %c0_24] : memref<56x64xf32, #tpu.memory_space<vmem>>, vector<48x64xf32>
    %c1_25 = arith.constant 1 : index
    %c0_26 = arith.constant 0 : index
    %c0_27 = arith.constant 0 : index
    %22 = vector.load %arg3[%c1_25, %c0_26, %c0_27] : memref<3x64x64xf32, #tpu.memory_space<vmem>>, vector<1x64x64xf32>
    %23 = vector.shape_cast %22 : vector<1x64x64xf32> to vector<64x64xf32>
    %cst_28 = arith.constant dense<0.000000e+00> : vector<48x64xf32>
    %24 = tpu.matmul %21, %23, %cst_28 {dimension_numbers = #tpu.dot_dimension_numbers<[1], [0], [0], [1], [0, 0, 1, 1], [], []>} : vector<48x64xf32>, vector<64x64xf32>, vector<48x64xf32> -> vector<48x64xf32>
    %25 = arith.addf %20, %24 : vector<48x64xf32>
    %c2_29 = arith.constant 2 : index
    %c0_30 = arith.constant 0 : index
    %26 = vector.load %arg8[%c2_29, %c0_30] : memref<56x64xf32, #tpu.memory_space<vmem>>, vector<48x64xf32>
    %c2_31 = arith.constant 2 : index
    %c0_32 = arith.constant 0 : index
    %c0_33 = arith.constant 0 : index
    %27 = vector.load %arg3[%c2_31, %c0_32, %c0_33] : memref<3x64x64xf32, #tpu.memory_space<vmem>>, vector<1x64x64xf32>
    %28 = vector.shape_cast %27 : vector<1x64x64xf32> to vector<64x64xf32>
    %cst_34 = arith.constant dense<0.000000e+00> : vector<48x64xf32>
    %29 = tpu.matmul %26, %28, %cst_34 {dimension_numbers = #tpu.dot_dimension_numbers<[1], [0], [0], [1], [0, 0, 1, 1], [], []>} : vector<48x64xf32>, vector<64x64xf32>, vector<48x64xf32> -> vector<48x64xf32>
    %30 = arith.addf %25, %29 : vector<48x64xf32>
    %cst_35 = arith.constant 0.000000e+00 : f32
    %31 = vector.broadcast %cst_35 : f32 to vector<48x64xf32>
    %32 = arith.maximumf %30, %31 : vector<48x64xf32>
    %c0_36 = arith.constant 0 : index
    %c0_37 = arith.constant 0 : index
    %c0_38 = arith.constant 0 : index
    %33 = vector.load %arg4[%c0_36, %c0_37, %c0_38] : memref<2x48x64xf32, #tpu.memory_space<vmem>>, vector<1x48x64xf32>
    %34 = vector.shape_cast %33 : vector<1x48x64xf32> to vector<48x64xf32>
    %35 = arith.mulf %32, %34 : vector<48x64xf32>
    %cst_39 = arith.constant dense<0.000000e+00> : vector<48xf32>
    %36 = vector.multi_reduction <add>, %35, %cst_39 [1] : vector<48x64xf32> to vector<48xf32>
    %37 = vector.shape_cast %36 : vector<48xf32> to vector<48x1xf32>
    %c1_40 = arith.constant 1 : index
    %c0_41 = arith.constant 0 : index
    %c0_42 = arith.constant 0 : index
    %38 = vector.load %arg4[%c1_40, %c0_41, %c0_42] : memref<2x48x64xf32, #tpu.memory_space<vmem>>, vector<1x48x64xf32>
    %39 = vector.shape_cast %38 : vector<1x48x64xf32> to vector<48x64xf32>
    %40 = arith.mulf %32, %39 : vector<48x64xf32>
    %cst_43 = arith.constant dense<0.000000e+00> : vector<48xf32>
    %41 = vector.multi_reduction <add>, %40, %cst_43 [1] : vector<48x64xf32> to vector<48xf32>
    %42 = vector.shape_cast %41 : vector<48xf32> to vector<48x1xf32>
    %c0_44 = arith.constant 0 : index
    %c0_45 = arith.constant 0 : index
    %43 = vector.load %arg5[%c0_44, %c0_45] : memref<4x48xf32, #tpu.memory_space<vmem>>, vector<4x48xf32>
    %cst_46 = arith.constant dense<0.000000e+00> : vector<4x1xf32>
    %44 = tpu.matmul %43, %37, %cst_46 {dimension_numbers = #tpu.dot_dimension_numbers<[1], [0], [0], [1], [0, 0, 1, 1], [], []>} : vector<4x48xf32>, vector<48x1xf32>, vector<4x1xf32> -> vector<4x1xf32>
    %c0_47 = arith.constant 0 : index
    %c0_48 = arith.constant 0 : index
    %45 = vector.load %arg6[%c0_47, %c0_48] : memref<1x2xf32, #tpu.memory_space<vmem>>, vector<1x1xf32>
    %46 = vector.broadcast %45 : vector<1x1xf32> to vector<4x1xf32>
    %47 = arith.addf %44, %46 : vector<4x1xf32>
    %cst_49 = arith.constant dense<0.000000e+00> : vector<4x1xf32>
    %48 = tpu.matmul %43, %42, %cst_49 {dimension_numbers = #tpu.dot_dimension_numbers<[1], [0], [0], [1], [0, 0, 1, 1], [], []>} : vector<4x48xf32>, vector<48x1xf32>, vector<4x1xf32> -> vector<4x1xf32>
    %c0_50 = arith.constant 0 : index
    %c1_51 = arith.constant 1 : index
    %49 = vector.load %arg6[%c0_50, %c1_51] : memref<1x2xf32, #tpu.memory_space<vmem>>, vector<1x1xf32>
    %50 = vector.broadcast %49 : vector<1x1xf32> to vector<4x1xf32>
    %51 = arith.addf %48, %50 : vector<4x1xf32>
    %52 = arith.maximumf %47, %51 : vector<4x1xf32>
    %53 = arith.subf %47, %52 : vector<4x1xf32>
    %54 = math.exp %53 : vector<4x1xf32>
    %55 = arith.subf %51, %52 : vector<4x1xf32>
    %56 = math.exp %55 : vector<4x1xf32>
    %57 = arith.addf %54, %56 : vector<4x1xf32>
    %58 = tpu.reciprocal %57 {approx = true} : vector<4x1xf32> -> vector<4x1xf32>
    %59 = arith.mulf %54, %58 : vector<4x1xf32>
    %c0_52 = arith.constant 0 : index
    %c0_53 = arith.constant 0 : index
    %60 = vector.load %arg7[%c0_52, %c0_53] : memref<4x2xf32, #tpu.memory_space<vmem>>, vector<4x1xf32>
    tpu.vector_store %arg7[%c0_52, %c0_53], %59 {strides = array<i32>} : memref<4x2xf32, #tpu.memory_space<vmem>>, vector<4x1xf32>,
    %61 = arith.mulf %56, %58 : vector<4x1xf32>
    %c0_54 = arith.constant 0 : index
    %c1_55 = arith.constant 1 : index
    %62 = vector.load %arg7[%c0_54, %c1_55] : memref<4x2xf32, #tpu.memory_space<vmem>>, vector<4x1xf32>
    tpu.vector_store %arg7[%c0_54, %c1_55], %61 {strides = array<i32>} : memref<4x2xf32, #tpu.memory_space<vmem>>, vector<4x1xf32>,
    return
  }
  func.func @transform_0(%arg0: i32) -> (i32, i32) {
    %c0_i32 = arith.constant 0 : i32
    %c0_i32_0 = arith.constant 0 : i32
    %c0_i32_1 = arith.constant 0 : i32
    return %c0_i32, %c0_i32_0 : i32, i32
  }
  func.func @transform_1(%arg0: i32) -> (i32, i32, i32) {
    %c0_i32 = arith.constant 0 : i32
    %c0_i32_0 = arith.constant 0 : i32
    %c0_i32_1 = arith.constant 0 : i32
    %c0_i32_2 = arith.constant 0 : i32
    return %c0_i32, %c0_i32_0, %c0_i32_1 : i32, i32, i32
  }
  func.func @transform_2(%arg0: i32) -> (i32, i32, i32) {
    %c0_i32 = arith.constant 0 : i32
    %c0_i32_0 = arith.constant 0 : i32
    %c0_i32_1 = arith.constant 0 : i32
    %c0_i32_2 = arith.constant 0 : i32
    return %c0_i32, %c0_i32_0, %c0_i32_1 : i32, i32, i32
  }
  func.func @transform_3(%arg0: i32) -> (i32, i32, i32) {
    %c0_i32 = arith.constant 0 : i32
    %c0_i32_0 = arith.constant 0 : i32
    %c0_i32_1 = arith.constant 0 : i32
    %c0_i32_2 = arith.constant 0 : i32
    return %c0_i32, %c0_i32_0, %c0_i32_1 : i32, i32, i32
  }
  func.func @transform_4(%arg0: i32) -> (i32, i32) {
    %c0_i32 = arith.constant 0 : i32
    %c0_i32_0 = arith.constant 0 : i32
    %c0_i32_1 = arith.constant 0 : i32
    return %c0_i32, %c0_i32_0 : i32, i32
  }
  func.func @transform_5(%arg0: i32) -> (i32, i32) {
    %c0_i32 = arith.constant 0 : i32
    %c0_i32_0 = arith.constant 0 : i32
    %c0_i32_1 = arith.constant 0 : i32
    return %c0_i32, %c0_i32_0 : i32, i32
  }
  func.func @transform_6(%arg0: i32) -> (i32, i32) {
    %c0_i32 = arith.constant 0 : i32
    %c0_i32_0 = arith.constant 0 : i32
    %c0_i32_1 = arith.constant 0 : i32
    return %c0_i32, %c0_i32_0 : i32, i32
  }
}

</mosaic_0001>

<llo_original>
// kernel: stock_model_forward.1
$region0: #{stock_model_forward.1}
  #allocation0 [shape = 'u32[]', space=smem, size = 0x4, offset = 0x4, fixed_abs, tag = 'smem constant byte address 0x4 - core index']
  #allocation1 [shape = 'u32[144,128]{1,0:T(1,128)}', space=vmem, size = 0x12000, scoped, tag = 'internal scratch']
  #allocation2 [shape = 'f32[56,64]{1,0:T(8,128)}', space=vmem, size = 0x7000, scoped, tag = 'scratch operand']
  %s0 = inlined_call_operand.vmem [shape: f32[64,16], index: 0, kind: input, shape index: {}]
  %s1 = inlined_call_operand.vmem [shape: f32[3,16,64], index: 1, kind: input, shape index: {}]
  %s2 = inlined_call_operand.vmem [shape: f32[3,64,64], index: 2, kind: input, shape index: {}]
  %s3 = inlined_call_operand.vmem [shape: f32[2,48,64], index: 3, kind: input, shape index: {}]
  %s4 = inlined_call_operand.vmem [shape: f32[4,48], index: 4, kind: input, shape index: {}]
  %s5 = inlined_call_operand.vmem [shape: f32[1,2], index: 5, kind: input, shape index: {}]
  %s6 = inlined_call_operand.vmem [shape: f32[4,2], index: 6, kind: output, shape index: {}]
  %s7 = sld [smem:[#allocation0]]
  $region34: #{stock_model_forward.1} parent=0
    _
  %s9 = ssub.s32 1, %s7
  %s10 = scalar_select 0, %s9, %s7
  // Predicated region
  $region2: #{stock_model_forward.1} parent=0 // pred_check
    _
  $region3: #{stock_model_forward.1} parent=0 // pred_check_branch
    %12 = sbr.rel (0) target = $region5
  $region4: #{stock_model_forward.1} parent=0 // pred_region
    _
  $region5: #{stock_model_forward.1} parent=0 // pred_fallthru
    _
  // Predicated region
  $region6: #{stock_model_forward.1} parent=0 // pred_check
    _
  $region7: #{stock_model_forward.1} parent=0 // pred_check_branch
    %14 = sbr.rel (0) target = $region9
  $region8: #{stock_model_forward.1} parent=0 // pred_region
    _
  $region9: #{stock_model_forward.1} parent=0 // pred_fallthru
    _
  // Predicated region
  $region10: #{stock_model_forward.1} parent=0 // pred_check
    _
  $region11: #{stock_model_forward.1} parent=0 // pred_check_branch
    %16 = sbr.rel (0) target = $region13
  $region12: #{stock_model_forward.1} parent=0 // pred_region
    _
  $region13: #{stock_model_forward.1} parent=0 // pred_fallthru
    _
  // Predicated region
  $region14: #{stock_model_forward.1} parent=0 // pred_check
    _
  $region15: #{stock_model_forward.1} parent=0 // pred_check_branch
    %18 = sbr.rel (0) target = $region17
  $region16: #{stock_model_forward.1} parent=0 // pred_region
    _
  $region17: #{stock_model_forward.1} parent=0 // pred_fallthru
    _
  // Predicated region
  $region18: #{stock_model_forward.1} parent=0 // pred_check
    _
  $region19: #{stock_model_forward.1} parent=0 // pred_check_branch
    %20 = sbr.rel (0) target = $region21
  $region20: #{stock_model_forward.1} parent=0 // pred_region
    _
  $region21: #{stock_model_forward.1} parent=0 // pred_fallthru
    _
  // Predicated region
  $region22: #{stock_model_forward.1} parent=0 // pred_check
    _
  $region23: #{stock_model_forward.1} parent=0 // pred_check_branch
    %22 = sbr.rel (0) target = $region25
  $region24: #{stock_model_forward.1} parent=0 // pred_region
    _
  $region25: #{stock_model_forward.1} parent=0 // pred_fallthru
    _
  %v23 = vld [vmem:[%s0] sm:$0xff]
  %v24 = vld [vmem:[%s0 + $0x8] sm:$0xff]
  %v25 = vld [vmem:[%s0 + $0x10] sm:$0xff]
  %v26 = vld [vmem:[%s0 + $0x18] sm:$0xff]
  %v27 = vld [vmem:[%s0 + $0x20] sm:$0xff]
  %v28 = vld [vmem:[%s0 + $0x28] sm:$0xff]
  %v29 = vld [vmem:[%s0 + $0x30] sm:$0xff]
  %v30 = vld [vmem:[%s1] sm:$0xff]
  %v31 = vld [vmem:[%s1 + $0x8] sm:$0xff]
  %v32 = vld [vmem:[%s0 + $0x1] sm:$0xff]
  %v33 = vld [vmem:[%s0 + $0x9] sm:$0xff]
  %v34 = vld [vmem:[%s0 + $0x11] sm:$0xff]
  %v35 = vld [vmem:[%s0 + $0x19] sm:$0xff]
  %v36 = vld [vmem:[%s0 + $0x21] sm:$0xff]
  %v37 = vld [vmem:[%s0 + $0x29] sm:$0xff]
  %v38 = vld [vmem:[%s0 + $0x31] sm:$0xff]
  %s39 = scalar_lea.vmem %s1, 16
  %v40 = vld [vmem:[%s39] sm:$0xff]
  %v41 = vld [vmem:[%s39 + $0x8] sm:$0xff]
  %vm42 = vcmask 130048
  %v44 = vsel %vm42, %v32, 0
  %v47 = vsel %vm42, %v33, 0
  %v50 = vsel %vm42, %v34, 0
  %v53 = vsel %vm42, %v35, 0
  %v56 = vsel %vm42, %v36, 0
  %v59 = vsel %vm42, %v37, 0
  %v62 = vsel %vm42, %v38, 0
  %64 = vmatprep.subr.mxu0 0.0
  %65 = vmatpush1.msra.mxu0 %v40
  %66 = vmatprep.subr.mxu0 0.0
  %67 = vmatpush1.msra.mxu0 %v41
  %68 = vmatprep.subr.mxu0 0.0
  %69 = vmatpush1.msra.mxu0 0.0
  %70 = vmatprep.subr.mxu0 0.0
  %71 = vmatpush1.msra.mxu0 0.0
  %72 = vmatprep.subr.mxu0 0.0
  %73 = vmatpush1.msra.mxu0 0.0
  %74 = vmatprep.subr.mxu0 0.0
  %75 = vmatpush1.msra.mxu0 0.0
  %76 = vmatprep.subr.mxu0 0.0
  %77 = vmatpush1.msra.mxu0 0.0
  %78 = vmatprep.subr.mxu0 0.0
  %79 = vmatpush1.msra.mxu0 0.0
  %80 = vmatprep.subr.mxu0 0.0
  %81 = vmatpush1.msra.mxu0 0.0
  %82 = vmatprep.subr.mxu0 0.0
  %83 = vmatpush1.msra.mxu0 0.0
  %84 = vmatprep.subr.mxu0 0.0
  %85 = vmatpush1.msra.mxu0 0.0
  %86 = vmatprep.subr.mxu0 0.0
  %87 = vmatpush1.msra.mxu0 0.0
  %88 = vmatprep.subr.mxu0 0.0
  %89 = vmatpush1.msra.mxu0 0.0
  %90 = vmatprep.subr.mxu0 0.0
  %91 = vmatpush1.msra.mxu0 0.0
  %92 = vmatprep.subr.mxu0 0.0
  %93 = vmatpush1.msra.mxu0 0.0
  %94 = vmatprep.subr.mxu0 0.0
  %95 = vmatpush1.msra.mxu0 0.0
  %96 = vmatprep.subr.mxu0 0.0
  %97 = vmatpush1.msra.mxu0 0.0
  %98 = vmatprep.subr.mxu0 0.0
  %99 = vmatpush1.msra.mxu0 0.0
  %100 = vmatprep.subr.mxu0 0.0
  %101 = vmatpush1.msra.mxu0 0.0
  %102 = vmatprep.subr.mxu0 0.0
  %103 = vmatpush1.msra.mxu0 0.0
  %104 = vmatprep.subr.mxu0 0.0
  %105 = vmatpush1.msra.mxu0 0.0
  %106 = vmatprep.subr.mxu0 0.0
  %107 = vmatpush1.msra.mxu0 0.0
  %108 = vmatprep.subr.mxu0 0.0
  %109 = vmatpush1.msra.mxu0 0.0
  %110 = vmatprep.subr.mxu0 0.0
  %111 = vmatpush1.msra.mxu0 0.0
  %112 = vmatprep.subr.mxu0 0.0
  %113 = vmatpush1.msra.mxu0 0.0
  %114 = vmatprep.subr.mxu0 0.0
  %115 = vmatpush1.msra.mxu0 0.0
  %116 = vmatprep.subr.mxu0 0.0
  %117 = vmatpush1.msra.mxu0 0.0
  %118 = vmatprep.subr.mxu0 0.0
  %119 = vmatpush1.msra.mxu0 0.0
  %120 = vmatprep.subr.mxu0 0.0
  %121 = vmatpush1.msra.mxu0 0.0
  %122 = vmatprep.subr.mxu0 0.0
  %123 = vmatpush1.msra.mxu0 0.0
  %124 = vmatprep.subr.mxu0 0.0
  %125 = vmatpush1.msra.mxu0 0.0
  %126 = vmatprep.subr.mxu0 0.0
  %127 = vmatpush1.msra.mxu0 0.0
  %128 = vmatprep.mubr.f32.mxu0 0.0
  %129 = vmatmul.mubr.f32.gmra.mrb[0].mxu0 %v44
  %v130 = vpop.f32.mrb[0].mxu0
  %v131 = vadd.f32 0.0, %v130
  %v132 = vpop.f32.mrb[0].mxu0
  %133 = vmatprep.mubr.f32.mxu0 0.0
  %134 = vmatmul.mubr.f32.gmra.mrb[0].mxu0 %v47
  %v135 = vpop.f32.mrb[0].mxu0
  %v136 = vadd.f32 0.0, %v135
  %v137 = vpop.f32.mrb[0].mxu0
  %138 = vmatprep.mubr.f32.mxu0 0.0
  %139 = vmatmul.mubr.f32.gmra.mrb[0].mxu0 %v50
  %v140 = vpop.f32.mrb[0].mxu0
  %v141 = vadd.f32 0.0, %v140
  %v142 = vpop.f32.mrb[0].mxu0
  %143 = vmatprep.mubr.f32.mxu0 0.0
  %144 = vmatmul.mubr.f32.gmra.mrb[0].mxu0 %v53
  %v145 = vpop.f32.mrb[0].mxu0
  %v146 = vadd.f32 0.0, %v145
  %v147 = vpop.f32.mrb[0].mxu0
  %148 = vmatprep.mubr.f32.mxu0 0.0
  %149 = vmatmul.mubr.f32.gmra.mrb[0].mxu0 %v56
  %v150 = vpop.f32.mrb[0].mxu0
  %v151 = vadd.f32 0.0, %v150
  %v152 = vpop.f32.mrb[0].mxu0
  %153 = vmatprep.mubr.f32.mxu0 0.0
  %154 = vmatmul.mubr.f32.gmra.mrb[0].mxu0 %v59
  %v155 = vpop.f32.mrb[0].mxu0
  %v156 = vadd.f32 0.0, %v155
  %v157 = vpop.f32.mrb[0].mxu0
  %158 = vmatprep.mubr.f32.mxu0 0.0
  %159 = vmatmul.mubr.f32.gmra.mrb[0].mxu0 %v62
  %v160 = vpop.f32.mrb[0].mxu0
  %v161 = vadd.f32 0.0, %v160
  %v162 = vpop.f32.mrb[0].mxu0
  %163 = vdwg.mxu0
  %v165 = vsel %vm42, %v23, 0
  %v168 = vsel %vm42, %v24, 0
  %v171 = vsel %vm42, %v25, 0
  %v174 = vsel %vm42, %v26, 0
  %v177 = vsel %vm42, %v27, 0
  %v180 = vsel %vm42, %v28, 0
  %v183 = vsel %vm42, %v29, 0
  %185 = vmatprep.subr.mxu0 0.0
  %186 = vmatpush1.msra.mxu0 %v30
  %187 = vmatprep.subr.mxu0 0.0
  %188 = vmatpush1.msra.mxu0 %v31
  %189 = vmatprep.subr.mxu0 0.0
  %190 = vmatpush1.msra.mxu0 0.0
  %191 = vmatprep.subr.mxu0 0.0
  %192 = vmatpush1.msra.mxu0 0.0
  %193 = vmatprep.subr.mxu0 0.0
  %194 = vmatpush1.msra.mxu0 0.0
  %195 = vmatprep.subr.mxu0 0.0
  %196 = vmatpush1.msra.mxu0 0.0
  %197 = vmatprep.subr.mxu0 0.0
  %198 = vmatpush1.msra.mxu0 0.0
  %199 = vmatprep.subr.mxu0 0.0
  %200 = vmatpush1.msra.mxu0 0.0
  %201 = vmatprep.subr.mxu0 0.0
  %202 = vmatpush1.msra.mxu0 0.0
  %203 = vmatprep.subr.mxu0 0.0
  %204 = vmatpush1.msra.mxu0 0.0
  %205 = vmatprep.subr.mxu0 0.0
  %206 = vmatpush1.msra.mxu0 0.0
  %207 = vmatprep.subr.mxu0 0.0
  %208 = vmatpush1.msra.mxu0 0.0
  %209 = vmatprep.subr.mxu0 0.0
  %210 = vmatpush1.msra.mxu0 0.0
  %211 = vmatprep.subr.mxu0 0.0
  %212 = vmatpush1.msra.mxu0 0.0
  %213 = vmatprep.subr.mxu0 0.0
  %214 = vmatpush1.msra.mxu0 0.0
  %215 = vmatprep.subr.mxu0 0.0
  %216 = vmatpush1.msra.mxu0 0.0
  %217 = vmatprep.subr.mxu0 0.0
  %218 = vmatpush1.msra.mxu0 0.0
  %219 = vmatprep.subr.mxu0 0.0
  %220 = vmatpush1.msra.mxu0 0.0
  %221 = vmatprep.subr.mxu0 0.0
  %222 = vmatpush1.msra.mxu0 0.0
  %223 = vmatprep.subr.mxu0 0.0
  %224 = vmatpush1.msra.mxu0 0.0
  %225 = vmatprep.subr.mxu0 0.0
  %226 = vmatpush1.msra.mxu0 0.0
  %227 = vmatprep.subr.mxu0 0.0
  %228 = vmatpush1.msra.mxu0 0.0
  %229 = vmatprep.subr.mxu0 0.0
  %230 = vmatpush1.msra.mxu0 0.0
  %231 = vmatprep.subr.mxu0 0.0
  %232 = vmatpush1.msra.mxu0 0.0
  %233 = vmatprep.subr.mxu0 0.0
  %234 = vmatpush1.msra.mxu0 0.0
  %235 = vmatprep.subr.mxu0 0.0
  %236 = vmatpush1.msra.mxu0 0.0
  %237 = vmatprep.subr.mxu0 0.0
  %238 = vmatpush1.msra.mxu0 0.0
  %239 = vmatprep.subr.mxu0 0.0
  %240 = vmatpush1.msra.mxu0 0.0
  %241 = vmatprep.subr.mxu0 0.0
  %242 = vmatpush1.msra.mxu0 0.0
  %243 = vmatprep.subr.mxu0 0.0
  %244 = vmatpush1.msra.mxu0 0.0
  %245 = vmatprep.subr.mxu0 0.0
  %246 = vmatpush1.msra.mxu0 0.0
  %247 = vmatprep.subr.mxu0 0.0
  %248 = vmatpush1.msra.mxu0 0.0
  %249 = vmatprep.mubr.f32.mxu0 0.0
  %250 = vmatmul.mubr.f32.gmra.mrb[0].mxu0 %v165
  %v251 = vpop.f32.mrb[0].mxu0
  %v252 = vadd.f32 %v131, %v251
  %v253 = vpop.f32.mrb[0].mxu0
  %254 = vmatprep.mubr.f32.mxu0 0.0
  %255 = vmatmul.mubr.f32.gmra.mrb[0].mxu0 %v168
  %v256 = vpop.f32.mrb[0].mxu0
  %v257 = vadd.f32 %v136, %v256
  %v258 = vpop.f32.mrb[0].mxu0
  %259 = vmatprep.mubr.f32.mxu0 0.0
  %260 = vmatmul.mubr.f32.gmra.mrb[0].mxu0 %v171
  %v261 = vpop.f32.mrb[0].mxu0
  %v262 = vadd.f32 %v141, %v261
  %v263 = vpop.f32.mrb[0].mxu0
  %264 = vmatprep.mubr.f32.mxu0 0.0
  %265 = vmatmul.mubr.f32.gmra.mrb[0].mxu0 %v174
  %v266 = vpop.f32.mrb[0].mxu0
  %v267 = vadd.f32 %v146, %v266
  %v268 = vpop.f32.mrb[0].mxu0
  %269 = vmatprep.mubr.f32.mxu0 0.0
  %270 = vmatmul.mubr.f32.gmra.mrb[0].mxu0 %v177
  %v271 = vpop.f32.mrb[0].mxu0
  %v272 = vadd.f32 %v151, %v271
  %v273 = vpop.f32.mrb[0].mxu0
  %274 = vmatprep.mubr.f32.mxu0 0.0
  %275 = vmatmul.mubr.f32.gmra.mrb[0].mxu0 %v180
  %v276 = vpop.f32.mrb[0].mxu0
  %v277 = vadd.f32 %v156, %v276
  %v278 = vpop.f32.mrb[0].mxu0
  %279 = vmatprep.mubr.f32.mxu0 0.0
  %280 = vmatmul.mubr.f32.gmra.mrb[0].mxu0 %v183
  %v281 = vpop.f32.mrb[0].mxu0
  %v282 = vadd.f32 %v161, %v281
  %v283 = vpop.f32.mrb[0].mxu0
  %284 = vdwg.mxu0
  %v285 = vld [vmem:[%s0 + $0x2] sm:$0xff]
  %v286 = vld [vmem:[%s0 + $0xa] sm:$0xff]
  %v287 = vld [vmem:[%s0 + $0x12] sm:$0xff]
  %v288 = vld [vmem:[%s0 + $0x1a] sm:$0xff]
  %v289 = vld [vmem:[%s0 + $0x22] sm:$0xff]
  %v290 = vld [vmem:[%s0 + $0x2a] sm:$0xff]
  %v291 = vld [vmem:[%s0 + $0x32] sm:$0xff]
  %s292 = scalar_lea.vmem %s1, 32
  %v293 = vld [vmem:[%s292] sm:$0xff]
  %v294 = vld [vmem:[%s292 + $0x8] sm:$0xff]
  %v296 = vsel %vm42, %v285, 0
  %v299 = vsel %vm42, %v286, 0
  %v302 = vsel %vm42, %v287, 0
  %v305 = vsel %vm42, %v288, 0
  %v308 = vsel %vm42, %v289, 0
  %v311 = vsel %vm42, %v290, 0
  %v314 = vsel %vm42, %v291, 0
  %316 = vmatprep.subr.mxu0 0.0
  %317 = vmatpush1.msra.mxu0 %v293
  %318 = vmatprep.subr.mxu0 0.0
  %319 = vmatpush1.msra.mxu0 %v294
  %320 = vmatprep.subr.mxu0 0.0
  %321 = vmatpush1.msra.mxu0 0.0
  %322 = vmatprep.subr.mxu0 0.0
  %323 = vmatpush1.msra.mxu0 0.0
  %324 = vmatprep.subr.mxu0 0.0
  %325 = vmatpush1.msra.mxu0 0.0
  %326 = vmatprep.subr.mxu0 0.0
  %327 = vmatpush1.msra.mxu0 0.0
  %328 = vmatprep.subr.mxu0 0.0
  %329 = vmatpush1.msra.mxu0 0.0
  %330 = vmatprep.subr.mxu0 0.0
  %331 = vmatpush1.msra.mxu0 0.0
  %332 = vmatprep.subr.mxu0 0.0
  %333 = vmatpush1.msra.mxu0 0.0
  %334 = vmatprep.subr.mxu0 0.0
  %335 = vmatpush1.msra.mxu0 0.0
  %336 = vmatprep.subr.mxu0 0.0
  %337 = vmatpush1.msra.mxu0 0.0
  %338 = vmatprep.subr.mxu0 0.0
  %339 = vmatpush1.msra.mxu0 0.0
  %340 = vmatprep.subr.mxu0 0.0
  %341 = vmatpush1.msra.mxu0 0.0
  %342 = vmatprep.subr.mxu0 0.0
  %343 = vmatpush1.msra.mxu0 0.0
  %344 = vmatprep.subr.mxu0 0.0
  %345 = vmatpush1.msra.mxu0 0.0
  %346 = vmatprep.subr.mxu0 0.0
  %347 = vmatpush1.msra.mxu0 0.0
  %348 = vmatprep.subr.mxu0 0.0
  %349 = vmatpush1.msra.mxu0 0.0
  %350 = vmatprep.subr.mxu0 0.0
  %351 = vmatpush1.msra.mxu0 0.0
  %352 = vmatprep.subr.mxu0 0.0
  %353 = vmatpush1.msra.mxu0 0.0
  %354 = vmatprep.subr.mxu0 0.0
  %355 = vmatpush1.msra.mxu0 0.0
  %356 = vmatprep.subr.mxu0 0.0
  %357 = vmatpush1.msra.mxu0 0.0
  %358 = vmatprep.subr.mxu0 0.0
  %359 = vmatpush1.msra.mxu0 0.0
  %360 = vmatprep.subr.mxu0 0.0
  %361 = vmatpush1.msra.mxu0 0.0
  %362 = vmatprep.subr.mxu0 0.0
  %363 = vmatpush1.msra.mxu0 0.0
  %364 = vmatprep.subr.mxu0 0.0
  %365 = vmatpush1.msra.mxu0 0.0
  %366 = vmatprep.subr.mxu0 0.0
  %367 = vmatpush1.msra.mxu0 0.0
  %368 = vmatprep.subr.mxu0 0.0
  %369 = vmatpush1.msra.mxu0 0.0
  %370 = vmatprep.subr.mxu0 0.0
  %371 = vmatpush1.msra.mxu0 0.0
  %372 = vmatprep.subr.mxu0 0.0
  %373 = vmatpush1.msra.mxu0 0.0
  %374 = vmatprep.subr.mxu0 0.0
  %375 = vmatpush1.msra.mxu0 0.0
  %376 = vmatprep.subr.mxu0 0.0
  %377 = vmatpush1.msra.mxu0 0.0
  %378 = vmatprep.subr.mxu0 0.0
  %379 = vmatpush1.msra.mxu0 0.0
  %380 = vmatprep.mubr.f32.mxu0 0.0
  %381 = vmatmul.mubr.f32.gmra.mrb[0].mxu0 %v296
  %v382 = vpop.f32.mrb[0].mxu0
  %v383 = vadd.f32 0.0, %v382
  %v384 = vpop.f32.mrb[0].mxu0
  %385 = vmatprep.mubr.f32.mxu0 0.0
  %386 = vmatmul.mubr.f32.gmra.mrb[0].mxu0 %v299
  %v387 = vpop.f32.mrb[0].mxu0
  %v388 = vadd.f32 0.0, %v387
  %v389 = vpop.f32.mrb[0].mxu0
  %390 = vmatprep.mubr.f32.mxu0 0.0
  %391 = vmatmul.mubr.f32.gmra.mrb[0].mxu0 %v302
  %v392 = vpop.f32.mrb[0].mxu0
  %v393 = vadd.f32 0.0, %v392
  %v394 = vpop.f32.mrb[0].mxu0
  %395 = vmatprep.mubr.f32.mxu0 0.0
  %396 = vmatmul.mubr.f32.gmra.mrb[0].mxu0 %v305
  %v397 = vpop.f32.mrb[0].mxu0
  %v398 = vadd.f32 0.0, %v397
  %v399 = vpop.f32.mrb[0].mxu0
  %400 = vmatprep.mubr.f32.mxu0 0.0
  %401 = vmatmul.mubr.f32.gmra.mrb[0].mxu0 %v308
  %v402 = vpop.f32.mrb[0].mxu0
  %v403 = vadd.f32 0.0, %v402
  %v404 = vpop.f32.mrb[0].mxu0
  %405 = vmatprep.mubr.f32.mxu0 0.0
  %406 = vmatmul.mubr.f32.gmra.mrb[0].mxu0 %v311
  %v407 = vpop.f32.mrb[0].mxu0
  %v408 = vadd.f32 0.0, %v407
  %v409 = vpop.f32.mrb[0].mxu0
  %410 = vmatprep.mubr.f32.mxu0 0.0
  %411 = vmatmul.mubr.f32.gmra.mrb[0].mxu0 %v314
  %v412 = vpop.f32.mrb[0].mxu0
  %v413 = vadd.f32 0.0, %v412
  %v414 = vpop.f32.mrb[0].mxu0
  %415 = vdwg.mxu0
  %v416 = vadd.f32 %v252, %v383
  %v417 = vadd.f32 %v257, %v388
  %v418 = vadd.f32 %v262, %v393
  %v419 = vadd.f32 %v267, %v398
  %v420 = vadd.f32 %v272, %v403
  %v421 = vadd.f32 %v277, %v408
  %v422 = vadd.f32 %v282, %v413
  %v423 = vmax.f32 %v416, 0.0
  %v424 = vmax.f32 %v417, 0.0
  %v425 = vmax.f32 %v418, 0.0
  %v426 = vmax.f32 %v419, 0.0
  %v427 = vmax.f32 %v420, 0.0
  %v428 = vmax.f32 %v421, 0.0
  %v429 = vmax.f32 %v422, 0.0
  %vm430 = vcmask 523264
  %431 = vst.msk [vmem:[#allocation2] sm:$0xff] %vm430, %v423
  %432 = vst.msk [vmem:[#allocation2 + $0x8] sm:$0xff] %vm430, %v424
  %433 = vst.msk [vmem:[#allocation2 + $0x10] sm:$0xff] %vm430, %v425
  %434 = vst.msk [vmem:[#allocation2 + $0x18] sm:$0xff] %vm430, %v426
  %435 = vst.msk [vmem:[#allocation2 + $0x20] sm:$0xff] %vm430, %v427
  %436 = vst.msk [vmem:[#allocation2 + $0x28] sm:$0xff] %vm430, %v428
  %437 = vst.msk [vmem:[#allocation2 + $0x30] sm:$0xff] %vm430, %v429
  %v438 = vld [vmem:[#allocation2] sm:$0xff]
  %v439 = vld [vmem:[#allocation2 + $0x8] sm:$0xff]
  %v440 = vld [vmem:[#allocation2 + $0x10] sm:$0xff]
  %v441 = vld [vmem:[#allocation2 + $0x18] sm:$0xff]
  %v442 = vld [vmem:[#allocation2 + $0x20] sm:$0xff]
  %v443 = vld [vmem:[#allocation2 + $0x28] sm:$0xff]
  %v444 = vld [vmem:[%s2] sm:$0xff]
  %v445 = vld [vmem:[%s2 + $0x8] sm:$0xff]
  %v446 = vld [vmem:[%s2 + $0x10] sm:$0xff]
  %v447 = vld [vmem:[%s2 + $0x18] sm:$0xff]
  %v448 = vld [vmem:[%s2 + $0x20] sm:$0xff]
  %v449 = vld [vmem:[%s2 + $0x28] sm:$0xff]
  %v450 = vld [vmem:[%s2 + $0x30] sm:$0xff]
  %v451 = vld [vmem:[%s2 + $0x38] sm:$0xff]
  %v452 = vld [vmem:[#allocation2 + $0x1] sm:$0xff]
  %v453 = vld [vmem:[#allocation2 + $0x9] sm:$0xff]
  %v454 = vld [vmem:[#allocation2 + $0x11] sm:$0xff]
  %v455 = vld [vmem:[#allocation2 + $0x19] sm:$0xff]
  %v456 = vld [vmem:[#allocation2 + $0x21] sm:$0xff]
  %v457 = vld [vmem:[#allocation2 + $0x29] sm:$0xff]
  %s458 = scalar_lea.vmem %s2, 64
  %v459 = vld [vmem:[%s458] sm:$0xff]
  %v460 = vld [vmem:[%s458 + $0x8] sm:$0xff]
  %v461 = vld [vmem:[%s458 + $0x10] sm:$0xff]
  %v462 = vld [vmem:[%s458 + $0x18] sm:$0xff]
  %v463 = vld [vmem:[%s458 + $0x20] sm:$0xff]
  %v464 = vld [vmem:[%s458 + $0x28] sm:$0xff]
  %v465 = vld [vmem:[%s458 + $0x30] sm:$0xff]
  %v466 = vld [vmem:[%s458 + $0x38] sm:$0xff]
  %v468 = vsel %vm430, %v452, 0
  %v471 = vsel %vm430, %v453, 0
  %v474 = vsel %vm430, %v454, 0
  %v477 = vsel %vm430, %v455, 0
  %v480 = vsel %vm430, %v456, 0
  %v483 = vsel %vm430, %v457, 0
  %485 = vmatprep.subr.mxu0 0.0
  %486 = vmatpush1.msra.mxu0 %v459
  %487 = vmatprep.subr.mxu0 0.0
  %488 = vmatpush1.msra.mxu0 %v460
  %489 = vmatprep.subr.mxu0 0.0
  %490 = vmatpush1.msra.mxu0 %v461
  %491 = vmatprep.subr.mxu0 0.0
  %492 = vmatpush1.msra.mxu0 %v462
  %493 = vmatprep.subr.mxu0 0.0
  %494 = vmatpush1.msra.mxu0 %v463
  %495 = vmatprep.subr.mxu0 0.0
  %496 = vmatpush1.msra.mxu0 %v464
  %497 = vmatprep.subr.mxu0 0.0
  %498 = vmatpush1.msra.mxu0 %v465
  %499 = vmatprep.subr.mxu0 0.0
  %500 = vmatpush1.msra.mxu0 %v466
  %501 = vmatprep.subr.mxu0 0.0
  %502 = vmatpush1.msra.mxu0 0.0
  %503 = vmatprep.subr.mxu0 0.0
  %504 = vmatpush1.msra.mxu0 0.0
  %505 = vmatprep.subr.mxu0 0.0
  %506 = vmatpush1.msra.mxu0 0.0
  %507 = vmatprep.subr.mxu0 0.0
  %508 = vmatpush1.msra.mxu0 0.0
  %509 = vmatprep.subr.mxu0 0.0
  %510 = vmatpush1.msra.mxu0 0.0
  %511 = vmatprep.subr.mxu0 0.0
  %512 = vmatpush1.msra.mxu0 0.0
  %513 = vmatprep.subr.mxu0 0.0
  %514 = vmatpush1.msra.mxu0 0.0
  %515 = vmatprep.subr.mxu0 0.0
  %516 = vmatpush1.msra.mxu0 0.0
  %517 = vmatprep.subr.mxu0 0.0
  %518 = vmatpush1.msra.mxu0 0.0
  %519 = vmatprep.subr.mxu0 0.0
  %520 = vmatpush1.msra.mxu0 0.0
  %521 = vmatprep.subr.mxu0 0.0
  %522 = vmatpush1.msra.mxu0 0.0
  %523 = vmatprep.subr.mxu0 0.0
  %524 = vmatpush1.msra.mxu0 0.0
  %525 = vmatprep.subr.mxu0 0.0
  %526 = vmatpush1.msra.mxu0 0.0
  %527 = vmatprep.subr.mxu0 0.0
  %528 = vmatpush1.msra.mxu0 0.0
  %529 = vmatprep.subr.mxu0 0.0
  %530 = vmatpush1.msra.mxu0 0.0
  %531 = vmatprep.subr.mxu0 0.0
  %532 = vmatpush1.msra.mxu0 0.0
  %533 = vmatprep.subr.mxu0 0.0
  %534 = vmatpush1.msra.mxu0 0.0
  %535 = vmatprep.subr.mxu0 0.0
  %536 = vmatpush1.msra.mxu0 0.0
  %537 = vmatprep.subr.mxu0 0.0
  %538 = vmatpush1.msra.mxu0 0.0
  %539 = vmatprep.subr.mxu0 0.0
  %540 = vmatpush1.msra.mxu0 0.0
  %541 = vmatprep.subr.mxu0 0.0
  %542 = vmatpush1.msra.mxu0 0.0
  %543 = vmatprep.subr.mxu0 0.0
  %544 = vmatpush1.msra.mxu0 0.0
  %545 = vmatprep.subr.mxu0 0.0
  %546 = vmatpush1.msra.mxu0 0.0
  %547 = vmatprep.subr.mxu0 0.0
  %548 = vmatpush1.msra.mxu0 0.0
  %549 = vmatprep.mubr.f32.mxu0 0.0
  %550 = vmatmul.mubr.f32.gmra.mrb[0].mxu0 %v468
  %v551 = vpop.f32.mrb[0].mxu0
  %v552 = vadd.f32 0.0, %v551
  %v553 = vpop.f32.mrb[0].mxu0
  %554 = vmatprep.mubr.f32.mxu0 0.0
  %555 = vmatmul.mubr.f32.gmra.mrb[0].mxu0 %v471
  %v556 = vpop.f32.mrb[0].mxu0
  %v557 = vadd.f32 0.0, %v556
  %v558 = vpop.f32.mrb[0].mxu0
  %559 = vmatprep.mubr.f32.mxu0 0.0
  %560 = vmatmul.mubr.f32.gmra.mrb[0].mxu0 %v474
  %v561 = vpop.f32.mrb[0].mxu0
  %v562 = vadd.f32 0.0, %v561
  %v563 = vpop.f32.mrb[0].mxu0
  %564 = vmatprep.mubr.f32.mxu0 0.0
  %565 = vmatmul.mubr.f32.gmra.mrb[0].mxu0 %v477
  %v566 = vpop.f32.mrb[0].mxu0
  %v567 = vadd.f32 0.0, %v566
  %v568 = vpop.f32.mrb[0].mxu0
  %569 = vmatprep.mubr.f32.mxu0 0.0
  %570 = vmatmul.mubr.f32.gmra.mrb[0].mxu0 %v480
  %v571 = vpop.f32.mrb[0].mxu0
  %v572 = vadd.f32 0.0, %v571
  %v573 = vpop.f32.mrb[0].mxu0
  %574 = vmatprep.mubr.f32.mxu0 0.0
  %575 = vmatmul.mubr.f32.gmra.mrb[0].mxu0 %v483
  %v576 = vpop.f32.mrb[0].mxu0
  %v577 = vadd.f32 0.0, %v576
  %v578 = vpop.f32.mrb[0].mxu0
  %579 = vdwg.mxu0
  %v581 = vsel %vm430, %v438, 0
  %v584 = vsel %vm430, %v439, 0
  %v587 = vsel %vm430, %v440, 0
  %v590 = vsel %vm430, %v441, 0
  %v593 = vsel %vm430, %v442, 0
  %v596 = vsel %vm430, %v443, 0
  %598 = vmatprep.subr.mxu0 0.0
  %599 = vmatpush1.msra.mxu0 %v444
  %600 = vmatprep.subr.mxu0 0.0
  %601 = vmatpush1.msra.mxu0 %v445
  %602 = vmatprep.subr.mxu0 0.0
  %603 = vmatpush1.msra.mxu0 %v446
  %604 = vmatprep.subr.mxu0 0.0
  %605 = vmatpush1.msra.mxu0 %v447
  %606 = vmatprep.subr.mxu0 0.0
  %607 = vmatpush1.msra.mxu0 %v448
  %608 = vmatprep.subr.mxu0 0.0
  %609 = vmatpush1.msra.mxu0 %v449
  %610 = vmatprep.subr.mxu0 0.0
  %611 = vmatpush1.msra.mxu0 %v450
  %612 = vmatprep.subr.mxu0 0.0
  %613 = vmatpush1.msra.mxu0 %v451
  %614 = vmatprep.subr.mxu0 0.0
  %615 = vmatpush1.msra.mxu0 0.0
  %616 = vmatprep.subr.mxu0 0.0
  %617 = vmatpush1.msra.mxu0 0.0
  %618 = vmatprep.subr.mxu0 0.0
  %619 = vmatpush1.msra.mxu0 0.0
  %620 = vmatprep.subr.mxu0 0.0
  %621 = vmatpush1.msra.mxu0 0.0
  %622 = vmatprep.subr.mxu0 0.0
  %623 = vmatpush1.msra.mxu0 0.0
  %624 = vmatprep.subr.mxu0 0.0
  %625 = vmatpush1.msra.mxu0 0.0
  %626 = vmatprep.subr.mxu0 0.0
  %627 = vmatpush1.msra.mxu0 0.0
  %628 = vmatprep.subr.mxu0 0.0
  %629 = vmatpush1.msra.mxu0 0.0
  %630 = vmatprep.subr.mxu0 0.0
  %631 = vmatpush1.msra.mxu0 0.0
  %632 = vmatprep.subr.mxu0 0.0
  %633 = vmatpush1.msra.mxu0 0.0
  %634 = vmatprep.subr.mxu0 0.0
  %635 = vmatpush1.msra.mxu0 0.0
  %636 = vmatprep.subr.mxu0 0.0
  %637 = vmatpush1.msra.mxu0 0.0
  %638 = vmatprep.subr.mxu0 0.0
  %639 = vmatpush1.msra.mxu0 0.0
  %640 = vmatprep.subr.mxu0 0.0
  %641 = vmatpush1.msra.mxu0 0.0
  %642 = vmatprep.subr.mxu0 0.0
  %643 = vmatpush1.msra.mxu0 0.0
  %644 = vmatprep.subr.mxu0 0.0
  %645 = vmatpush1.msra.mxu0 0.0
  %646 = vmatprep.subr.mxu0 0.0
  %647 = vmatpush1.msra.mxu0 0.0
  %648 = vmatprep.subr.mxu0 0.0
  %649 = vmatpush1.msra.mxu0 0.0
  %650 = vmatprep.subr.mxu0 0.0
  %651 = vmatpush1.msra.mxu0 0.0
  %652 = vmatprep.subr.mxu0 0.0
  %653 = vmatpush1.msra.mxu0 0.0
  %654 = vmatprep.subr.mxu0 0.0
  %655 = vmatpush1.msra.mxu0 0.0
  %656 = vmatprep.subr.mxu0 0.0
  %657 = vmatpush1.msra.mxu0 0.0
  %658 = vmatprep.subr.mxu0 0.0
  %659 = vmatpush1.msra.mxu0 0.0
  %660 = vmatprep.subr.mxu0 0.0
  %661 = vmatpush1.msra.mxu0 0.0
  %662 = vmatprep.mubr.f32.mxu0 0.0
  %663 = vmatmul.mubr.f32.gmra.mrb[0].mxu0 %v581
  %v664 = vpop.f32.mrb[0].mxu0
  %v665 = vadd.f32 %v552, %v664
  %v666 = vpop.f32.mrb[0].mxu0
  %667 = vmatprep.mubr.f32.mxu0 0.0
  %668 = vmatmul.mubr.f32.gmra.mrb[0].mxu0 %v584
  %v669 = vpop.f32.mrb[0].mxu0
  %v670 = vadd.f32 %v557, %v669
  %v671 = vpop.f32.mrb[0].mxu0
  %672 = vmatprep.mubr.f32.mxu0 0.0
  %673 = vmatmul.mubr.f32.gmra.mrb[0].mxu0 %v587
  %v674 = vpop.f32.mrb[0].mxu0
  %v675 = vadd.f32 %v562, %v674
  %v676 = vpop.f32.mrb[0].mxu0
  %677 = vmatprep.mubr.f32.mxu0 0.0
  %678 = vmatmul.mubr.f32.gmra.mrb[0].mxu0 %v590
  %v679 = vpop.f32.mrb[0].mxu0
  %v680 = vadd.f32 %v567, %v679
  %v681 = vpop.f32.mrb[0].mxu0
  %682 = vmatprep.mubr.f32.mxu0 0.0
  %683 = vmatmul.mubr.f32.gmra.mrb[0].mxu0 %v593
  %v684 = vpop.f32.mrb[0].mxu0
  %v685 = vadd.f32 %v572, %v684
  %v686 = vpop.f32.mrb[0].mxu0
  %687 = vmatprep.mubr.f32.mxu0 0.0
  %688 = vmatmul.mubr.f32.gmra.mrb[0].mxu0 %v596
  %v689 = vpop.f32.mrb[0].mxu0
  %v690 = vadd.f32 %v577, %v689
  %v691 = vpop.f32.mrb[0].mxu0
  %692 = vdwg.mxu0
  %v693 = vld [vmem:[#allocation2 + $0x2] sm:$0xff]
  %v694 = vld [vmem:[#allocation2 + $0xa] sm:$0xff]
  %v695 = vld [vmem:[#allocation2 + $0x12] sm:$0xff]
  %v696 = vld [vmem:[#allocation2 + $0x1a] sm:$0xff]
  %v697 = vld [vmem:[#allocation2 + $0x22] sm:$0xff]
  %v698 = vld [vmem:[#allocation2 + $0x2a] sm:$0xff]
  %s699 = scalar_lea.vmem %s2, 128
  %v700 = vld [vmem:[%s699] sm:$0xff]
  %v701 = vld [vmem:[%s699 + $0x8] sm:$0xff]
  %v702 = vld [vmem:[%s699 + $0x10] sm:$0xff]
  %v703 = vld [vmem:[%s699 + $0x18] sm:$0xff]
  %v704 = vld [vmem:[%s699 + $0x20] sm:$0xff]
  %v705 = vld [vmem:[%s699 + $0x28] sm:$0xff]
  %v706 = vld [vmem:[%s699 + $0x30] sm:$0xff]
  %v707 = vld [vmem:[%s699 + $0x38] sm:$0xff]
  %v709 = vsel %vm430, %v693, 0
  %v712 = vsel %vm430, %v694, 0
  %v715 = vsel %vm430, %v695, 0
  %v718 = vsel %vm430, %v696, 0
  %v721 = vsel %vm430, %v697, 0
  %v724 = vsel %vm430, %v698, 0
  %726 = vmatprep.subr.mxu0 0.0
  %727 = vmatpush1.msra.mxu0 %v700
  %728 = vmatprep.subr.mxu0 0.0
  %729 = vmatpush1.msra.mxu0 %v701
  %730 = vmatprep.subr.mxu0 0.0
  %731 = vmatpush1.msra.mxu0 %v702
  %732 = vmatprep.subr.mxu0 0.0
  %733 = vmatpush1.msra.mxu0 %v703
  %734 = vmatprep.subr.mxu0 0.0
  %735 = vmatpush1.msra.mxu0 %v704
  %736 = vmatprep.subr.mxu0 0.0
  %737 = vmatpush1.msra.mxu0 %v705
  %738 = vmatprep.subr.mxu0 0.0
  %739 = vmatpush1.msra.mxu0 %v706
  %740 = vmatprep.subr.mxu0 0.0
  %741 = vmatpush1.msra.mxu0 %v707
  %742 = vmatprep.subr.mxu0 0.0
  %743 = vmatpush1.msra.mxu0 0.0
  %744 = vmatprep.subr.mxu0 0.0
  %745 = vmatpush1.msra.mxu0 0.0
  %746 = vmatprep.subr.mxu0 0.0
  %747 = vmatpush1.msra.mxu0 0.0
  %748 = vmatprep.subr.mxu0 0.0
  %749 = vmatpush1.msra.mxu0 0.0
  %750 = vmatprep.subr.mxu0 0.0
  %751 = vmatpush1.msra.mxu0 0.0
  %752 = vmatprep.subr.mxu0 0.0
  %753 = vmatpush1.msra.mxu0 0.0
  %754 = vmatprep.subr.mxu0 0.0
  %755 = vmatpush1.msra.mxu0 0.0
  %756 = vmatprep.subr.mxu0 0.0
  %757 = vmatpush1.msra.mxu0 0.0
  %758 = vmatprep.subr.mxu0 0.0
  %759 = vmatpush1.msra.mxu0 0.0
  %760 = vmatprep.subr.mxu0 0.0
  %761 = vmatpush1.msra.mxu0 0.0
  %762 = vmatprep.subr.mxu0 0.0
  %763 = vmatpush1.msra.mxu0 0.0
  %764 = vmatprep.subr.mxu0 0.0
  %765 = vmatpush1.msra.mxu0 0.0
  %766 = vmatprep.subr.mxu0 0.0
  %767 = vmatpush1.msra.mxu0 0.0
  %768 = vmatprep.subr.mxu0 0.0
  %769 = vmatpush1.msra.mxu0 0.0
  %770 = vmatprep.subr.mxu0 0.0
  %771 = vmatpush1.msra.mxu0 0.0
  %772 = vmatprep.subr.mxu0 0.0
  %773 = vmatpush1.msra.mxu0 0.0
  %774 = vmatprep.subr.mxu0 0.0
  %775 = vmatpush1.msra.mxu0 0.0
  %776 = vmatprep.subr.mxu0 0.0
  %777 = vmatpush1.msra.mxu0 0.0
  %778 = vmatprep.subr.mxu0 0.0
  %779 = vmatpush1.msra.mxu0 0.0
  %780 = vmatprep.subr.mxu0 0.0
  %781 = vmatpush1.msra.mxu0 0.0
  %782 = vmatprep.subr.mxu0 0.0
  %783 = vmatpush1.msra.mxu0 0.0
  %784 = vmatprep.subr.mxu0 0.0
  %785 = vmatpush1.msra.mxu0 0.0
  %786 = vmatprep.subr.mxu0 0.0
  %787 = vmatpush1.msra.mxu0 0.0
  %788 = vmatprep.subr.mxu0 0.0
  %789 = vmatpush1.msra.mxu0 0.0
  %790 = vmatprep.mubr.f32.mxu0 0.0
  %791 = vmatmul.mubr.f32.gmra.mrb[0].mxu0 %v709
  %v792 = vpop.f32.mrb[0].mxu0
  %v793 = vadd.f32 0.0, %v792
  %v794 = vpop.f32.mrb[0].mxu0
  %795 = vmatprep.mubr.f32.mxu0 0.0
  %796 = vmatmul.mubr.f32.gmra.mrb[0].mxu0 %v712
  %v797 = vpop.f32.mrb[0].mxu0
  %v798 = vadd.f32 0.0, %v797
  %v799 = vpop.f32.mrb[0].mxu0
  %800 = vmatprep.mubr.f32.mxu0 0.0
  %801 = vmatmul.mubr.f32.gmra.mrb[0].mxu0 %v715
  %v802 = vpop.f32.mrb[0].mxu0
  %v803 = vadd.f32 0.0, %v802
  %v804 = vpop.f32.mrb[0].mxu0
  %805 = vmatprep.mubr.f32.mxu0 0.0
  %806 = vmatmul.mubr.f32.gmra.mrb[0].mxu0 %v718
  %v807 = vpop.f32.mrb[0].mxu0
  %v808 = vadd.f32 0.0, %v807
  %v809 = vpop.f32.mrb[0].mxu0
  %810 = vmatprep.mubr.f32.mxu0 0.0
  %811 = vmatmul.mubr.f32.gmra.mrb[0].mxu0 %v721
  %v812 = vpop.f32.mrb[0].mxu0
  %v813 = vadd.f32 0.0, %v812
  %v814 = vpop.f32.mrb[0].mxu0
  %815 = vmatprep.mubr.f32.mxu0 0.0
  %816 = vmatmul.mubr.f32.gmra.mrb[0].mxu0 %v724
  %v817 = vpop.f32.mrb[0].mxu0
  %v818 = vadd.f32 0.0, %v817
  %v819 = vpop.f32.mrb[0].mxu0
  %820 = vdwg.mxu0
  %v821 = vadd.f32 %v665, %v793
  %v822 = vadd.f32 %v670, %v798
  %v823 = vadd.f32 %v675, %v803
  %v824 = vadd.f32 %v680, %v808
  %v825 = vadd.f32 %v685, %v813
  %v826 = vadd.f32 %v690, %v818
  %v827 = vmax.f32 %v821, 0.0
  %v828 = vmax.f32 %v822, 0.0
  %v829 = vmax.f32 %v823, 0.0
  %v830 = vmax.f32 %v824, 0.0
  %v831 = vmax.f32 %v825, 0.0
  %v832 = vmax.f32 %v826, 0.0
  %v833 = vld [vmem:[%s3] sm:$0xff]
  %v834 = vld [vmem:[%s3 + $0x8] sm:$0xff]
  %v835 = vld [vmem:[%s3 + $0x10] sm:$0xff]
  %v836 = vld [vmem:[%s3 + $0x18] sm:$0xff]
  %v837 = vld [vmem:[%s3 + $0x20] sm:$0xff]
  %v838 = vld [vmem:[%s3 + $0x28] sm:$0xff]
  %v839 = vmul.f32 %v827, %v833
  %v840 = vmul.f32 %v828, %v834
  %v841 = vmul.f32 %v829, %v835
  %v842 = vmul.f32 %v830, %v836
  %v843 = vmul.f32 %v831, %v837
  %v844 = vmul.f32 %v832, %v838
  %v845 = vsel %vm430, %v839, 0.0
  %846 = vadd.xlane.f32.xlu0 %v845
  %v847 = vpop.xlane.xlu0 %846
  %v848 = vsel %vm430, %v840, 0.0
  %849 = vadd.xlane.f32.xlu0 %v848
  %v850 = vpop.xlane.xlu0 %849
  %v851 = vsel %vm430, %v841, 0.0
  %852 = vadd.xlane.f32.xlu0 %v851
  %v853 = vpop.xlane.xlu0 %852
  %v854 = vsel %vm430, %v842, 0.0
  %855 = vadd.xlane.f32.xlu0 %v854
  %v856 = vpop.xlane.xlu0 %855
  %v857 = vsel %vm430, %v843, 0.0
  %858 = vadd.xlane.f32.xlu0 %v857
  %v859 = vpop.xlane.xlu0 %858
  %v860 = vsel %vm430, %v844, 0.0
  %861 = vadd.xlane.f32.xlu0 %v860
  %v862 = vpop.xlane.xlu0 %861
  %s863 = scalar_lea.vmem %s3, 48
  %v864 = vld [vmem:[%s863] sm:$0xff]
  %v865 = vld [vmem:[%s863 + $0x8] sm:$0xff]
  %v866 = vld [vmem:[%s863 + $0x10] sm:$0xff]
  %v867 = vld [vmem:[%s863 + $0x18] sm:$0xff]
  %v868 = vld [vmem:[%s863 + $0x20] sm:$0xff]
  %v869 = vld [vmem:[%s863 + $0x28] sm:$0xff]
  %v870 = vmul.f32 %v827, %v864
  %v871 = vmul.f32 %v828, %v865
  %v872 = vmul.f32 %v829, %v866
  %v873 = vmul.f32 %v830, %v867
  %v874 = vmul.f32 %v831, %v868
  %v875 = vmul.f32 %v832, %v869
  %v876 = vsel %vm430, %v870, 0.0
  %877 = vadd.xlane.f32.xlu0 %v876
  %v878 = vpop.xlane.xlu0 %877
  %v879 = vsel %vm430, %v871, 0.0
  %880 = vadd.xlane.f32.xlu0 %v879
  %v881 = vpop.xlane.xlu0 %880
  %v882 = vsel %vm430, %v872, 0.0
  %883 = vadd.xlane.f32.xlu0 %v882
  %v884 = vpop.xlane.xlu0 %883
  %v885 = vsel %vm430, %v873, 0.0
  %886 = vadd.xlane.f32.xlu0 %v885
  %v887 = vpop.xlane.xlu0 %886
  %v888 = vsel %vm430, %v874, 0.0
  %889 = vadd.xlane.f32.xlu0 %v888
  %v890 = vpop.xlane.xlu0 %889
  %v891 = vsel %vm430, %v875, 0.0
  %892 = vadd.xlane.f32.xlu0 %v891
  %v893 = vpop.xlane.xlu0 %892
  %v894 = vld [vmem:[%s4] sm:$0xf]
  %v895 = vld [vmem:[%s5] sm:$0x1]
  %v897 = vlaneseq
  %v898 = vshrl.u32 %v897, 7
  %v899 = vsub.s32 0, %v898
  %v900 = vrot.slane %v895, %v899
  %vm902 = vcmask 392192
  %v904 = vsel %vm902, %v894, 0
  %906 = vmatprep.subr.mxu0 0.0
  %907 = vmatpush1.msra.mxu0 %v847
  %908 = vmatprep.subr.mxu0 0.0
  %909 = vmatpush1.msra.mxu0 %v850
  %910 = vmatprep.subr.mxu0 0.0
  %911 = vmatpush1.msra.mxu0 %v853
  %912 = vmatprep.subr.mxu0 0.0
  %913 = vmatpush1.msra.mxu0 %v856
  %914 = vmatprep.subr.mxu0 0.0
  %915 = vmatpush1.msra.mxu0 %v859
  %916 = vmatprep.subr.mxu0 0.0
  %917 = vmatpush1.msra.mxu0 %v862
  %918 = vmatprep.subr.mxu0 0.0
  %919 = vmatpush1.msra.mxu0 0.0
  %920 = vmatprep.subr.mxu0 0.0
  %921 = vmatpush1.msra.mxu0 0.0
  %922 = vmatprep.subr.mxu0 0.0
  %923 = vmatpush1.msra.mxu0 0.0
  %924 = vmatprep.subr.mxu0 0.0
  %925 = vmatpush1.msra.mxu0 0.0
  %926 = vmatprep.subr.mxu0 0.0
  %927 = vmatpush1.msra.mxu0 0.0
  %928 = vmatprep.subr.mxu0 0.0
  %929 = vmatpush1.msra.mxu0 0.0
  %930 = vmatprep.subr.mxu0 0.0
  %931 = vmatpush1.msra.mxu0 0.0
  %932 = vmatprep.subr.mxu0 0.0
  %933 = vmatpush1.msra.mxu0 0.0
  %934 = vmatprep.subr.mxu0 0.0
  %935 = vmatpush1.msra.mxu0 0.0
  %936 = vmatprep.subr.mxu0 0.0
  %937 = vmatpush1.msra.mxu0 0.0
  %938 = vmatprep.subr.mxu0 0.0
  %939 = vmatpush1.msra.mxu0 0.0
  %940 = vmatprep.subr.mxu0 0.0
  %941 = vmatpush1.msra.mxu0 0.0
  %942 = vmatprep.subr.mxu0 0.0
  %943 = vmatpush1.msra.mxu0 0.0
  %944 = vmatprep.subr.mxu0 0.0
  %945 = vmatpush1.msra.mxu0 0.0
  %946 = vmatprep.subr.mxu0 0.0
  %947 = vmatpush1.msra.mxu0 0.0
  %948 = vmatprep.subr.mxu0 0.0
  %949 = vmatpush1.msra.mxu0 0.0
  %950 = vmatprep.subr.mxu0 0.0
  %951 = vmatpush1.msra.mxu0 0.0
  %952 = vmatprep.subr.mxu0 0.0
  %953 = vmatpush1.msra.mxu0 0.0
  %954 = vmatprep.subr.mxu0 0.0
  %955 = vmatpush1.msra.mxu0 0.0
  %956 = vmatprep.subr.mxu0 0.0
  %957 = vmatpush1.msra.mxu0 0.0
  %958 = vmatprep.subr.mxu0 0.0
  %959 = vmatpush1.msra.mxu0 0.0
  %960 = vmatprep.subr.mxu0 0.0
  %961 = vmatpush1.msra.mxu0 0.0
  %962 = vmatprep.subr.mxu0 0.0
  %963 = vmatpush1.msra.mxu0 0.0
  %964 = vmatprep.subr.mxu0 0.0
  %965 = vmatpush1.msra.mxu0 0.0
  %966 = vmatprep.subr.mxu0 0.0
  %967 = vmatpush1.msra.mxu0 0.0
  %968 = vmatprep.subr.mxu0 0.0
  %969 = vmatpush1.msra.mxu0 0.0
  %970 = vmatprep.mubr.f32.mxu0 0.0
  %971 = vmatmul.mubr.f32.gmra.mrb[0].mxu0 %v904
  %v972 = vpop.f32.mrb[0].mxu0
  %v973 = vadd.f32 %v900, %v972
  %v974 = vpop.f32.mrb[0].mxu0
  %975 = vdwg.mxu0
  %976 = vrot.lane.b32.xlu0 %v900, 127
  %v977 = vpop.permute.xlu0 %976
  %979 = vmatprep.subr.mxu0 0.0
  %980 = vmatpush1.msra.mxu0 %v878
  %981 = vmatprep.subr.mxu0 0.0
  %982 = vmatpush1.msra.mxu0 %v881
  %983 = vmatprep.subr.mxu0 0.0
  %984 = vmatpush1.msra.mxu0 %v884
  %985 = vmatprep.subr.mxu0 0.0
  %986 = vmatpush1.msra.mxu0 %v887
  %987 = vmatprep.subr.mxu0 0.0
  %988 = vmatpush1.msra.mxu0 %v890
  %989 = vmatprep.subr.mxu0 0.0
  %990 = vmatpush1.msra.mxu0 %v893
  %991 = vmatprep.subr.mxu0 0.0
  %992 = vmatpush1.msra.mxu0 0.0
  %993 = vmatprep.subr.mxu0 0.0
  %994 = vmatpush1.msra.mxu0 0.0
  %995 = vmatprep.subr.mxu0 0.0
  %996 = vmatpush1.msra.mxu0 0.0
  %997 = vmatprep.subr.mxu0 0.0
  %998 = vmatpush1.msra.mxu0 0.0
  %999 = vmatprep.subr.mxu0 0.0
  %1000 = vmatpush1.msra.mxu0 0.0
  %1001 = vmatprep.subr.mxu0 0.0
  %1002 = vmatpush1.msra.mxu0 0.0
  %1003 = vmatprep.subr.mxu0 0.0
  %1004 = vmatpush1.msra.mxu0 0.0
  %1005 = vmatprep.subr.mxu0 0.0
  %1006 = vmatpush1.msra.mxu0 0.0
  %1007 = vmatprep.subr.mxu0 0.0
  %1008 = vmatpush1.msra.mxu0 0.0
  %1009 = vmatprep.subr.mxu0 0.0
  %1010 = vmatpush1.msra.mxu0 0.0
  %1011 = vmatprep.subr.mxu0 0.0
  %1012 = vmatpush1.msra.mxu0 0.0
  %1013 = vmatprep.subr.mxu0 0.0
  %1014 = vmatpush1.msra.mxu0 0.0
  %1015 = vmatprep.subr.mxu0 0.0
  %1016 = vmatpush1.msra.mxu0 0.0
  %1017 = vmatprep.subr.mxu0 0.0
  %1018 = vmatpush1.msra.mxu0 0.0
  %1019 = vmatprep.subr.mxu0 0.0
  %1020 = vmatpush1.msra.mxu0 0.0
  %1021 = vmatprep.subr.mxu0 0.0
  %1022 = vmatpush1.msra.mxu0 0.0
  %1023 = vmatprep.subr.mxu0 0.0
  %1024 = vmatpush1.msra.mxu0 0.0
  %1025 = vmatprep.subr.mxu0 0.0
  %1026 = vmatpush1.msra.mxu0 0.0
  %1027 = vmatprep.subr.mxu0 0.0
  %1028 = vmatpush1.msra.mxu0 0.0
  %1029 = vmatprep.subr.mxu0 0.0
  %1030 = vmatpush1.msra.mxu0 0.0
  %1031 = vmatprep.subr.mxu0 0.0
  %1032 = vmatpush1.msra.mxu0 0.0
  %1033 = vmatprep.subr.mxu0 0.0
  %1034 = vmatpush1.msra.mxu0 0.0
  %1035 = vmatprep.subr.mxu0 0.0
  %1036 = vmatpush1.msra.mxu0 0.0
  %1037 = vmatprep.subr.mxu0 0.0
  %1038 = vmatpush1.msra.mxu0 0.0
  %1039 = vmatprep.subr.mxu0 0.0
  %1040 = vmatpush1.msra.mxu0 0.0
  %1041 = vmatprep.subr.mxu0 0.0
  %1042 = vmatpush1.msra.mxu0 0.0
  %1043 = vmatprep.mubr.f32.mxu0 0.0
  %1044 = vmatmul.mubr.f32.gmra.mrb[0].mxu0 %v904
  %v1045 = vpop.f32.mrb[0].mxu0
  %v1046 = vadd.f32 %v977, %v1045
  %v1047 = vpop.f32.mrb[0].mxu0
  %1048 = vdwg.mxu0
  %v1049 = vmax.f32 %v973, %v1046
  %v1050 = vsub.f32 %v973, %v1049
  %v1051 = vmul.f32 %v1050, 1.442695
  %v1052 = vpow.pop %v1051
  %v1053 = vsub.f32 %v1046, %v1049
  %v1054 = vmul.f32 %v1053, 1.442695
  %v1055 = vpow.pop %v1054
  %v1056 = vadd.f32 %v1052, %v1055
  %v1057 = vrcp.pop %v1056
  %v1058 = vmul.f32 %v1052, %v1057
  %vm1059 = vcmask 3072
  %1060 = vst.msk [vmem:[%s6] sm:$0xf] %vm1059, %v1058
  %v1061 = vmul.f32 %v1055, %v1057
  %1063 = vrot.lane.b32.xlu0 %v1061, 1
  %v1064 = vpop.permute.xlu0 %1063
  %vm1066 = vcmask 11272
  %1067 = vst.msk [vmem:[%s6] sm:$0xf] %vm1066, %v1064
  // Predicated region
  $region26: #{stock_model_forward.1} parent=0 // pred_check
    _
  $region27: #{stock_model_forward.1} parent=0 // pred_check_branch
    %1069 = sbr.rel (0) target = $region29
  $region28: #{stock_model_forward.1} parent=0 // pred_region
    _
  $region29: #{stock_model_forward.1} parent=0 // pred_fallthru
    _
  // Predicated region
  $region30: #{stock_model_forward.1} parent=0 // pred_check
    _
  $region31: #{stock_model_forward.1} parent=0 // pred_check_branch
    %1071 = sbr.rel (0) target = $region33
  $region32: #{stock_model_forward.1} parent=0 // pred_region
    _
  $region33: #{stock_model_forward.1} parent=0 // pred_fallthru
    _

</llo_original>
